<compile_context>
chip_gen: v6e
topology: v6e:2x2x1
jax: 0.10.0
libtpu: 0.0.40
codegen_flags: <defaults>
</compile_context>

<pallas_src>
import functools

import jax
import jax.numpy as jnp
from jax.experimental import pallas as pl
from jax.experimental.pallas import tpu as pltpu


_SQRT_2_OVER_PI = 0.7978845608028654  # sqrt(2/pi)

# Conservative VMEM budgets (bytes). 64 MiB is the physical VMEM per
# TensorCore on v7x; keep the weight-residency decision well under it.
_VMEM_CAP = 64 << 20
_RESIDENT_BUDGET = 40 << 20


def _gelu_tanh(x):
    # Matches torch.nn.GELU(approximate='tanh'); x is f32 inside the kernel.
    return 0.5 * x * (1.0 + jnp.tanh(_SQRT_2_OVER_PI * (x + 0.044715 * x * x * x)))


def _round_up(x, m):
    return ((x + m - 1) // m) * m


def _vmem_estimate(tm, C, H, th, a_bytes, w_bytes):
    """Rough VMEM footprint of one grid step (double-buffered blocks + temps)."""
    return (
        2 * tm * C * a_bytes        # x tile (double-buffered)
        + 2 * tm * C * a_bytes      # out tile
        + 2 * C * th * w_bytes      # w_fc chunk
        + 2 * th * C * w_bytes      # w_proj chunk
        + 2 * 8 * th * w_bytes      # b_fc chunk (sublane-padded)
        + 2 * 8 * C * w_bytes       # b_proj
        + tm * C * 4                # f32 accumulator / final tile
        + 2 * tm * th * 4           # h / g f32 intermediates
    )


def _pick_tile_h(H, C, tm, a_bytes, w_bytes, requested):
    """Prefer th == H (resident weights); otherwise largest 128-multiple chunk
    of H that fits the VMEM budget."""
    if requested is not None:
        assert H % requested == 0, "tile_h must divide H"
        return requested
    if _vmem_estimate(tm, C, H, H, a_bytes, w_bytes) <= _RESIDENT_BUDGET:
        return H
    for cand in (4096, 2048, 1024, 512, 256, 128):
        if cand < H and H % cand == 0 and (
            _vmem_estimate(tm, C, H, cand, a_bytes, w_bytes) <= _RESIDENT_BUDGET
        ):
            return cand
    return H  # tiny / irregular H: single chunk


# ----------------------------------------------------------------------------
# Kernels
# ----------------------------------------------------------------------------
def mlp_kernel_fused(x_ref, w1_ref, b1_ref, w2_ref, b2_ref, o_ref):
    # Grid: (M tiles [parallel],).  Full weights are resident in VMEM.
    #   x_ref:  (TM, C)   w1_ref: (C, H)   b1_ref: (1, H)
    #   w2_ref: (H, C)    b2_ref: (1, C)   o_ref:  (TM, C)
    x = x_ref[...]
    h = jnp.dot(x, w1_ref[...], preferred_element_type=jnp.float32)
    h = h + b1_ref[...].astype(jnp.float32)
    g = _gelu_tanh(h)
    y = jnp.dot(g.astype(w2_ref.dtype), w2_ref[...],
                preferred_element_type=jnp.float32)
    y = y + b2_ref[...].astype(jnp.float32)
    o_ref[...] = y.astype(o_ref.dtype)


def mlp_kernel_chunked(x_ref, w1_ref, b1_ref, w2_ref, b2_ref, o_ref, acc_ref):
    # Grid: (M tiles [parallel], H chunks [arbitrary, reduction, innermost]).
    #   x_ref:  (TM, C)        activation tile (same block across all k)
    #   w1_ref: (C, TH)        c_fc weight chunk     b1_ref: (1, TH)
    #   w2_ref: (TH, C)        c_proj weight chunk   b2_ref: (1, C)
    #   o_ref:  (TM, C)        output tile
    #   acc_ref:(TM, C) f32    VMEM accumulator scratch
    k = pl.program_id(1)

    @pl.when(k == 0)
    def _init():
        acc_ref[...] = jnp.zeros_like(acc_ref)

    x = x_ref[...]
    h = jnp.dot(x, w1_ref[...], preferred_element_type=jnp.float32)
    h = h + b1_ref[...].astype(jnp.float32)
    g = _gelu_tanh(h)
    acc_ref[...] += jnp.dot(g.astype(w2_ref.dtype), w2_ref[...],
                            preferred_element_type=jnp.float32)

    @pl.when(k == pl.num_programs(1) - 1)
    def _finalize():
        y = acc_ref[...] + b2_ref[...].astype(jnp.float32)
        o_ref[...] = y.astype(o_ref.dtype)


# ----------------------------------------------------------------------------
# Wrapper
# ----------------------------------------------------------------------------
@functools.partial(jax.jit, static_argnames=("tile_m", "tile_h"))
def mlp_forward(x, w_fc, b_fc, w_proj, b_proj, *, tile_m=256, tile_h=None):
    """x: (B, T, C) -> (B, T, C), GPT-2 MLP forward."""
    B, T, C = x.shape
    H = w_fc.shape[1]  # 4 * C
    M = B * T

    a_bytes = jnp.dtype(x.dtype).itemsize
    w_bytes = jnp.dtype(w_fc.dtype).itemsize

    # ---- tile sizing -------------------------------------------------------
    tm = min(tile_m, _round_up(M, 8))          # large tiles, multiple of 8
    tm = _round_up(tm, 8)
    th = _pick_tile_h(H, C, tm, a_bytes, w_bytes, tile_h)

    # Pad M so the grid covers everything (tail rows are sliced off at the end).
    M_pad = _round_up(M, tm)
    x2d = x.reshape(M, C)
    if M_pad != M:
        x2d = jnp.pad(x2d, ((0, M_pad - M), (0, 0)))

    b_fc2 = b_fc.reshape(1, H)
    b_proj2 = b_proj.reshape(1, C)

    est = _vmem_estimate(tm, C, H, th, a_bytes, w_bytes)
    vmem_limit = min(max(int(est * 1.4) + (4 << 20), 32 << 20), _VMEM_CAP)

    if th == H:
        # ---- resident-weight path: 1-D grid over M tiles -------------------
        grid = (M_pad // tm,)
        out = pl.pallas_call(
            mlp_kernel_fused,
            out_shape=jax.ShapeDtypeStruct((M_pad, C), x.dtype),
            grid_spec=pltpu.PrefetchScalarGridSpec(
                num_scalar_prefetch=0,
                grid=grid,
                in_specs=[
                    pl.BlockSpec((tm, C), lambda i: (i, 0)),   # x tile
                    pl.BlockSpec((C, H), lambda i: (0, 0)),    # w_fc (resident)
                    pl.BlockSpec((1, H), lambda i: (0, 0)),    # b_fc
                    pl.BlockSpec((H, C), lambda i: (0, 0)),    # w_proj (resident)
                    pl.BlockSpec((1, C), lambda i: (0, 0)),    # b_proj
                ],
                out_specs=pl.BlockSpec((tm, C), lambda i: (i, 0)),
            ),
            compiler_params=pltpu.CompilerParams(
                dimension_semantics=("parallel",),
                vmem_limit_bytes=vmem_limit,
            ),
        )(x2d, w_fc, b_fc2, w_proj, b_proj2)
    else:
        # ---- chunked-H fallback: 2-D grid, H reduction innermost -----------
        grid = (M_pad // tm, H // th)
        out = pl.pallas_call(
            mlp_kernel_chunked,
            out_shape=jax.ShapeDtypeStruct((M_pad, C), x.dtype),
            grid_spec=pltpu.PrefetchScalarGridSpec(
                num_scalar_prefetch=0,
                grid=grid,
                in_specs=[
                    pl.BlockSpec((tm, C), lambda i, k: (i, 0)),   # x tile (k-invariant)
                    pl.BlockSpec((C, th), lambda i, k: (0, k)),   # w_fc chunk
                    pl.BlockSpec((1, th), lambda i, k: (0, k)),   # b_fc chunk
                    pl.BlockSpec((th, C), lambda i, k: (k, 0)),   # w_proj chunk
                    pl.BlockSpec((1, C), lambda i, k: (0, 0)),    # b_proj
                ],
                out_specs=pl.BlockSpec((tm, C), lambda i, k: (i, 0)),
                scratch_shapes=[pltpu.VMEM((tm, C), jnp.float32)],
            ),
            compiler_params=pltpu.CompilerParams(
                dimension_semantics=("parallel", "arbitrary"),
                vmem_limit_bytes=vmem_limit,
            ),
        )(x2d, w_fc, b_fc2, w_proj, b_proj2)

    if M_pad != M:
        out = out[:M]
    return out.reshape(B, T, C)


# ----------------------------------------------------------------------------
# Reference / test harness
# ----------------------------------------------------------------------------
def init_params(key, n_embd, dtype=jnp.float32):
    """Deterministic synthetic parameters with nn.Linear-like shapes."""
    k1, k2, k3, k4 = jax.random.split(key, 4)
    hidden = 4 * n_embd
    # stored as (in, out); equivalent to PyTorch's weight.T
    w_fc = jax.random.normal(k1, (n_embd, hidden), dtype) * 0.02
    b_fc = jax.random.normal(k2, (hidden,), dtype) * 0.02
    w_proj = jax.random.normal(k3, (hidden, n_embd), dtype) * 0.02
    b_proj = jax.random.normal(k4, (n_embd,), dtype) * 0.02
    return w_fc, b_fc, w_proj, b_proj


def mlp_reference(x, w_fc, b_fc, w_proj, b_proj):
    h = x @ w_fc + b_fc
    g = _gelu_tanh(h)
    return g @ w_proj + b_proj


if __name__ == "__main__":
    B, T, C = 2, 8, 32  # batch=2, seq=8, n_embd=32 (hidden = 4*C = 128)
    key = jax.random.PRNGKey(0)
    kx, kp = jax.random.split(key)

    x = jax.random.normal(kx, (B, T, C), jnp.float32)
    w_fc, b_fc, w_proj, b_proj = init_params(kp, C)
    y_ref = mlp_reference(x, w_fc, b_fc, w_proj, b_proj)

    # f32, resident-weight (fused) path: tight tolerance vs pure-JAX reference.
    y = mlp_forward(x, w_fc, b_fc, w_proj, b_proj)
    y = jax.block_until_ready(y)
    assert y.shape == (B, T, C)
    assert jnp.allclose(y, y_ref, atol=1e-5, rtol=1e-5), "f32 fused mismatch"

    # Chunked-H fallback path (forced via tile_h): same math, same tolerance.
    y_c = mlp_forward(x, w_fc, b_fc, w_proj, b_proj, tile_h=4 * C // 2)
    y_c = jax.block_until_ready(y_c)
    assert jnp.allclose(y_c, y_ref, atol=1e-5, rtol=1e-5), "f32 chunked mismatch"

    # bf16 path (recommended for real model sizes): f32 accumulation inside the
    # kernel, loose tolerance vs the f32 reference.
    xb = x.astype(jnp.bfloat16)
    yb = mlp_forward(xb, w_fc.astype(jnp.bfloat16), b_fc.astype(jnp.bfloat16),
                     w_proj.astype(jnp.bfloat16), b_proj.astype(jnp.bfloat16))
    yb = jax.block_until_ready(yb)
    assert yb.shape == (B, T, C)
    assert jnp.allclose(yb.astype(jnp.float32), y_ref, atol=2e-2, rtol=5e-2), \
        "bf16 mismatch vs reference"

    print("KERNEL_OK")
</pallas_src>

<mosaic_0001>
module attributes {stable_mosaic.version = 11 : i64} {
  func.func @mlp_kernel_fused(%arg0: i32, %arg1: memref<16x32xf32, #tpu.memory_space<vmem>>, %arg2: memref<32x128xf32, #tpu.memory_space<vmem>>, %arg3: memref<1x128xf32, #tpu.memory_space<vmem>>, %arg4: memref<128x32xf32, #tpu.memory_space<vmem>>, %arg5: memref<1x32xf32, #tpu.memory_space<vmem>>, %arg6: memref<16x32xf32, #tpu.memory_space<vmem>>) attributes {dimension_semantics = [#tpu.dimension_semantics<parallel>], iteration_bounds = array<i64: 1>, scalar_prefetch = 0 : i64, scratch_operands = 0 : i64, tpu.core_type = #tpu.core_type<tc>, window_params = [{transform_indices = @transform_0, window_bounds = array<i64: 16, 32>}, {pipeline_mode = #tpu.pipeline_mode<synchronous>, transform_indices = @transform_1, window_bounds = array<i64: 32, 128>}, {pipeline_mode = #tpu.pipeline_mode<synchronous>, transform_indices = @transform_2, window_bounds = array<i64: 1, 128>}, {pipeline_mode = #tpu.pipeline_mode<synchronous>, transform_indices = @transform_3, window_bounds = array<i64: 128, 32>}, {pipeline_mode = #tpu.pipeline_mode<synchronous>, transform_indices = @transform_4, window_bounds = array<i64: 1, 32>}, {transform_indices = @transform_5, window_bounds = array<i64: 16, 32>}]} {
    %c0 = arith.constant 0 : index
    %c0_0 = arith.constant 0 : index
    %0 = vector.load %arg1[%c0, %c0_0] : memref<16x32xf32, #tpu.memory_space<vmem>>, vector<16x32xf32>
    %c0_1 = arith.constant 0 : index
    %c0_2 = arith.constant 0 : index
    %1 = vector.load %arg2[%c0_1, %c0_2] : memref<32x128xf32, #tpu.memory_space<vmem>>, vector<32x128xf32>
    %cst = arith.constant dense<0.000000e+00> : vector<16x128xf32>
    %2 = tpu.matmul %0, %1, %cst {dimension_numbers = #tpu.dot_dimension_numbers<[1], [0], [0], [1], [0, 0, 1, 1], [], []>} : vector<16x32xf32>, vector<32x128xf32>, vector<16x128xf32> -> vector<16x128xf32>
    %c0_3 = arith.constant 0 : index
    %c0_4 = arith.constant 0 : index
    %3 = vector.load %arg3[%c0_3, %c0_4] : memref<1x128xf32, #tpu.memory_space<vmem>>, vector<1x128xf32>
    %4 = vector.broadcast %3 : vector<1x128xf32> to vector<16x128xf32>
    %5 = arith.addf %2, %4 : vector<16x128xf32>
    %cst_5 = arith.constant 5.000000e-01 : f32
    %6 = vector.broadcast %cst_5 : f32 to vector<16x128xf32>
    %7 = arith.mulf %6, %5 : vector<16x128xf32>
    %cst_6 = arith.constant 4.471500e-02 : f32
    %8 = vector.broadcast %cst_6 : f32 to vector<16x128xf32>
    %9 = arith.mulf %8, %5 : vector<16x128xf32>
    %10 = arith.mulf %9, %5 : vector<16x128xf32>
    %11 = arith.mulf %10, %5 : vector<16x128xf32>
    %12 = arith.addf %5, %11 : vector<16x128xf32>
    %cst_7 = arith.constant 0.797884583 : f32
    %13 = vector.broadcast %cst_7 : f32 to vector<16x128xf32>
    %14 = arith.mulf %13, %12 : vector<16x128xf32>
    %15 = math.tanh %14 : vector<16x128xf32>
    %cst_8 = arith.constant 1.000000e+00 : f32
    %16 = vector.broadcast %cst_8 : f32 to vector<16x128xf32>
    %17 = arith.addf %16, %15 : vector<16x128xf32>
    %18 = arith.mulf %7, %17 : vector<16x128xf32>
    %c0_9 = arith.constant 0 : index
    %c0_10 = arith.constant 0 : index
    %19 = vector.load %arg4[%c0_9, %c0_10] : memref<128x32xf32, #tpu.memory_space<vmem>>, vector<128x32xf32>
    %cst_11 = arith.constant dense<0.000000e+00> : vector<16x32xf32>
    %20 = tpu.matmul %18, %19, %cst_11 {dimension_numbers = #tpu.dot_dimension_numbers<[1], [0], [0], [1], [0, 0, 1, 1], [], []>} : vector<16x128xf32>, vector<128x32xf32>, vector<16x32xf32> -> vector<16x32xf32>
    %c0_12 = arith.constant 0 : index
    %c0_13 = arith.constant 0 : index
    %21 = vector.load %arg5[%c0_12, %c0_13] : memref<1x32xf32, #tpu.memory_space<vmem>>, vector<1x32xf32>
    %22 = vector.broadcast %21 : vector<1x32xf32> to vector<16x32xf32>
    %23 = arith.addf %20, %22 : vector<16x32xf32>
    %c0_14 = arith.constant 0 : index
    %c0_15 = arith.constant 0 : index
    %24 = vector.load %arg6[%c0_14, %c0_15] : memref<16x32xf32, #tpu.memory_space<vmem>>, vector<16x32xf32>
    tpu.vector_store %arg6[%c0_14, %c0_15], %23 {strides = array<i32>} : memref<16x32xf32, #tpu.memory_space<vmem>>, vector<16x32xf32>,
    return
  }
  func.func @transform_0(%arg0: i32) -> (i32, i32) {
    %c0_i32 = arith.constant 0 : i32
    %c0_i32_0 = arith.constant 0 : i32
    return %arg0, %c0_i32 : i32, i32
  }
  func.func @transform_1(%arg0: i32) -> (i32, i32) {
    %c0_i32 = arith.constant 0 : i32
    %c0_i32_0 = arith.constant 0 : i32
    %c0_i32_1 = arith.constant 0 : i32
    return %c0_i32, %c0_i32_0 : i32, i32
  }
  func.func @transform_2(%arg0: i32) -> (i32, i32) {
    %c0_i32 = arith.constant 0 : i32
    %c0_i32_0 = arith.constant 0 : i32
    %c0_i32_1 = arith.constant 0 : i32
    return %c0_i32, %c0_i32_0 : i32, i32
  }
  func.func @transform_3(%arg0: i32) -> (i32, i32) {
    %c0_i32 = arith.constant 0 : i32
    %c0_i32_0 = arith.constant 0 : i32
    %c0_i32_1 = arith.constant 0 : i32
    return %c0_i32, %c0_i32_0 : i32, i32
  }
  func.func @transform_4(%arg0: i32) -> (i32, i32) {
    %c0_i32 = arith.constant 0 : i32
    %c0_i32_0 = arith.constant 0 : i32
    %c0_i32_1 = arith.constant 0 : i32
    return %c0_i32, %c0_i32_0 : i32, i32
  }
  func.func @transform_5(%arg0: i32) -> (i32, i32) {
    %c0_i32 = arith.constant 0 : i32
    %c0_i32_0 = arith.constant 0 : i32
    return %arg0, %c0_i32 : i32, i32
  }
}

</mosaic_0001>

<llo_original>
// kernel: mlp_forward.1
$region0: #{mlp_forward.1}
  #allocation0 [shape = 'u32[]', space=smem, size = 0x4, offset = 0x4, fixed_abs, tag = 'smem constant byte address 0x4 - core index']
  #allocation1 [shape = 'u32[144,128]{1,0:T(1,128)}', space=vmem, size = 0x12000, scoped, tag = 'internal scratch']
  %s0 = inlined_call_operand.vmem [shape: f32[16,32], index: 0, kind: input, shape index: {}]
  %s1 = inlined_call_operand.vmem [shape: f32[32,128], index: 1, kind: input, shape index: {}]
  %s2 = inlined_call_operand.vmem [shape: f32[1,128], index: 2, kind: input, shape index: {}]
  %s3 = inlined_call_operand.vmem [shape: f32[128,32], index: 3, kind: input, shape index: {}]
  %s4 = inlined_call_operand.vmem [shape: f32[1,32], index: 4, kind: input, shape index: {}]
  %s5 = inlined_call_operand.hbm [shape: f32[16,32], index: 5, kind: output, shape index: {}]
  %s6 = sld [smem:[#allocation0]]
  $region30: #{mlp_forward.1} parent=0
    _
  %s8 = ssub.s32 1, %s6
  %s9 = scalar_select 0, %s8, %s6
  $region1: #{mlp_forward.1} parent=0
    #allocation2 [shape = 'u8[8192]{0}', space=vmem, size = 0x2000, scoped, tag = 'output window, operand 0, single buffered']
    #allocation3 [shape = 's32[1]{0}', space=sflag, size = 0x4, scoped, tag = 'scoped memory for mlp_forward.1']
    %10 = vsyncpa [#allocation3], 0
    // Predicated region
    $region2: #{mlp_forward.1} parent=1 // pred_check
      _
    $region3: #{mlp_forward.1} parent=1 // pred_check_branch
      %12 = sbr.rel (0) target = $region5
    $region4: #{mlp_forward.1} parent=1 // pred_region
      _
    $region5: #{mlp_forward.1} parent=1 // pred_fallthru
      _
    // Predicated region
    $region6: #{mlp_forward.1} parent=1 // pred_check
      _
    $region7: #{mlp_forward.1} parent=1 // pred_check_branch
      %14 = sbr.rel (0) target = $region9
    $region8: #{mlp_forward.1} parent=1 // pred_region
      _
    $region9: #{mlp_forward.1} parent=1 // pred_fallthru
      _
    // Predicated region
    $region10: #{mlp_forward.1} parent=1 // pred_check
      _
    $region11: #{mlp_forward.1} parent=1 // pred_check_branch
      %16 = sbr.rel (0) target = $region13
    $region12: #{mlp_forward.1} parent=1 // pred_region
      _
    $region13: #{mlp_forward.1} parent=1 // pred_fallthru
      _
    // Predicated region
    $region14: #{mlp_forward.1} parent=1 // pred_check
      _
    $region15: #{mlp_forward.1} parent=1 // pred_check_branch
      %18 = sbr.rel (0) target = $region17
    $region16: #{mlp_forward.1} parent=1 // pred_region
      _
    $region17: #{mlp_forward.1} parent=1 // pred_fallthru
      _
    // Predicated region
    $region18: #{mlp_forward.1} parent=1 // pred_check
      _
    $region19: #{mlp_forward.1} parent=1 // pred_check_branch
      %20 = sbr.rel (0) target = $region21
    $region20: #{mlp_forward.1} parent=1 // pred_region
      _
    $region21: #{mlp_forward.1} parent=1 // pred_fallthru
      _
    %v21 = vld [vmem:[%s0] sm:$0xff]
    %v22 = vld [vmem:[%s0 + $0x8] sm:$0xff]
    %v23 = vld [vmem:[%s1] sm:$0xff]
    %v24 = vld [vmem:[%s1 + $0x8] sm:$0xff]
    %v25 = vld [vmem:[%s1 + $0x10] sm:$0xff]
    %v26 = vld [vmem:[%s1 + $0x18] sm:$0xff]
    %v27 = vld [vmem:[%s2] sm:$0x1]
    %v29 = vlaneseq
    %v30 = vshrl.u32 %v29, 7
    %v31 = vsub.s32 0, %v30
    %v32 = vrot.slane %v27, %v31
    %vm34 = vcmask 261120
    %v36 = vsel %vm34, %v21, 0
    %v39 = vsel %vm34, %v22, 0
    %41 = vmatprep.subr.mxu0 0.0
    %42 = vmatpush1.msra.mxu0 0.0
    %43 = vmatprep.subr.mxu0 0.0
    %44 = vmatpush1.msra.mxu0 0.0
    %45 = vmatprep.subr.mxu0 0.0
    %46 = vmatpush1.msra.mxu0 0.0
    %47 = vmatprep.subr.mxu0 0.0
    %48 = vmatpush1.msra.mxu0 0.0
    %49 = vmatprep.subr.mxu0 0.0
    %50 = vmatpush1.msra.mxu0 0.0
    %51 = vmatprep.subr.mxu0 0.0
    %52 = vmatpush1.msra.mxu0 0.0
    %53 = vmatprep.subr.mxu0 0.0
    %54 = vmatpush1.msra.mxu0 0.0
    %55 = vmatprep.subr.mxu0 0.0
    %56 = vmatpush1.msra.mxu0 0.0
    %57 = vmatprep.subr.mxu0 0.0
    %58 = vmatpush1.msra.mxu0 0.0
    %59 = vmatprep.subr.mxu0 0.0
    %60 = vmatpush1.msra.mxu0 0.0
    %61 = vmatprep.subr.mxu0 0.0
    %62 = vmatpush1.msra.mxu0 0.0
    %63 = vmatprep.subr.mxu0 0.0
    %64 = vmatpush1.msra.mxu0 0.0
    %65 = vmatprep.subr.mxu0 0.0
    %66 = vmatpush1.msra.mxu0 %v26
    %67 = vmatprep.subr.mxu0 0.0
    %68 = vmatpush1.msra.mxu0 %v25
    %69 = vmatprep.subr.mxu0 0.0
    %70 = vmatpush1.msra.mxu0 %v24
    %71 = vmatprep.subr.mxu0 0.0
    %72 = vmatpush1.msra.mxu0 %v23
    %73 = vmatprep.subr.mxu0 0.0
    %74 = vmatpush2.msra.mxu0 0.0
    %75 = vmatprep.subr.mxu0 0.0
    %76 = vmatpush2.msra.mxu0 0.0
    %77 = vmatprep.subr.mxu0 0.0
    %78 = vmatpush2.msra.mxu0 0.0
    %79 = vmatprep.subr.mxu0 0.0
    %80 = vmatpush2.msra.mxu0 0.0
    %81 = vmatprep.subr.mxu0 0.0
    %82 = vmatpush2.msra.mxu0 0.0
    %83 = vmatprep.subr.mxu0 0.0
    %84 = vmatpush2.msra.mxu0 0.0
    %85 = vmatprep.subr.mxu0 0.0
    %86 = vmatpush2.msra.mxu0 0.0
    %87 = vmatprep.subr.mxu0 0.0
    %88 = vmatpush2.msra.mxu0 0.0
    %89 = vmatprep.subr.mxu0 0.0
    %90 = vmatpush2.msra.mxu0 0.0
    %91 = vmatprep.subr.mxu0 0.0
    %92 = vmatpush2.msra.mxu0 0.0
    %93 = vmatprep.subr.mxu0 0.0
    %94 = vmatpush2.msra.mxu0 0.0
    %95 = vmatprep.subr.mxu0 0.0
    %96 = vmatpush2.msra.mxu0 0.0
    %97 = vmatprep.subr.mxu0 0.0
    %98 = vmatpush2.msra.mxu0 0.0
    %99 = vmatprep.subr.mxu0 0.0
    %100 = vmatpush2.msra.mxu0 0.0
    %101 = vmatprep.subr.mxu0 0.0
    %102 = vmatpush2.msra.mxu0 0.0
    %103 = vmatprep.subr.mxu0 0.0
    %104 = vmatpush2.msra.mxu0 0.0
    %105 = vmatprep.mubr.f32.mxu0 0.0
    %106 = vmatmul.mubr.f32.gmra.mxu0 %v36
    %v107 = vpop.f32.mrf.mxu0
    %v108 = vadd.f32 %v32, %v107
    %v109 = vpop.f32.mrf.mxu0
    %110 = vmatprep.mubr.f32.mxu0 0.0
    %111 = vmatmul.mubr.f32.gmra.mxu0 %v39
    %v112 = vpop.f32.mrf.mxu0
    %v113 = vadd.f32 %v32, %v112
    %v114 = vpop.f32.mrf.mxu0
    %115 = vdwg.mxu0
    %v116 = vmul.f32 %v108, 0.5
    %v117 = vmul.f32 %v113, 0.5
    %v118 = vmul.f32 %v108, 0.044715
    %v119 = vmul.f32 %v113, 0.044715
    %v120 = vmul.f32 %v118, %v108
    %v121 = vmul.f32 %v119, %v113
    %v122 = vmul.f32 %v120, %v108
    %v123 = vmul.f32 %v121, %v113
    %v124 = vadd.f32 %v108, %v122
    %v125 = vadd.f32 %v113, %v123
    %v126 = vmul.f32 %v124, 0.7978846
    %v127 = vmul.f32 %v125, 0.7978846
    %v128 = vtanh.pop %v126
    %v129 = vtanh.pop %v127
    %v130 = vadd.f32 %v128, 1.0
    %v131 = vadd.f32 %v129, 1.0
    %v132 = vmul.f32 %v116, %v130
    %v133 = vmul.f32 %v117, %v131
    %v134 = vld [vmem:[%s3] sm:$0xff]
    %v135 = vld [vmem:[%s3 + $0x8] sm:$0xff]
    %v136 = vld [vmem:[%s3 + $0x10] sm:$0xff]
    %v137 = vld [vmem:[%s3 + $0x18] sm:$0xff]
    %v138 = vld [vmem:[%s3 + $0x20] sm:$0xff]
    %v139 = vld [vmem:[%s3 + $0x28] sm:$0xff]
    %v140 = vld [vmem:[%s3 + $0x30] sm:$0xff]
    %v141 = vld [vmem:[%s3 + $0x38] sm:$0xff]
    %v142 = vld [vmem:[%s3 + $0x40] sm:$0xff]
    %v143 = vld [vmem:[%s3 + $0x48] sm:$0xff]
    %v144 = vld [vmem:[%s3 + $0x50] sm:$0xff]
    %v145 = vld [vmem:[%s3 + $0x58] sm:$0xff]
    %v146 = vld [vmem:[%s3 + $0x60] sm:$0xff]
    %v147 = vld [vmem:[%s3 + $0x68] sm:$0xff]
    %v148 = vld [vmem:[%s3 + $0x70] sm:$0xff]
    %v149 = vld [vmem:[%s3 + $0x78] sm:$0xff]
    %v150 = vld [vmem:[%s4] sm:$0x1]
    %v152 = vlaneseq
    %v153 = vshrl.u32 %v152, 7
    %v154 = vsub.s32 0, %v153
    %v155 = vrot.slane %v150, %v154
    %157 = vmatprep.subr.mxu0 0.0
    %158 = vmatpush1.msra.mxu0 %v149
    %159 = vmatprep.subr.mxu0 0.0
    %160 = vmatpush1.msra.mxu0 %v148
    %161 = vmatprep.subr.mxu0 0.0
    %162 = vmatpush1.msra.mxu0 %v147
    %163 = vmatprep.subr.mxu0 0.0
    %164 = vmatpush1.msra.mxu0 %v146
    %165 = vmatprep.subr.mxu0 0.0
    %166 = vmatpush1.msra.mxu0 %v145
    %167 = vmatprep.subr.mxu0 0.0
    %168 = vmatpush1.msra.mxu0 %v144
    %169 = vmatprep.subr.mxu0 0.0
    %170 = vmatpush1.msra.mxu0 %v143
    %171 = vmatprep.subr.mxu0 0.0
    %172 = vmatpush1.msra.mxu0 %v142
    %173 = vmatprep.subr.mxu0 0.0
    %174 = vmatpush1.msra.mxu0 %v141
    %175 = vmatprep.subr.mxu0 0.0
    %176 = vmatpush1.msra.mxu0 %v140
    %177 = vmatprep.subr.mxu0 0.0
    %178 = vmatpush1.msra.mxu0 %v139
    %179 = vmatprep.subr.mxu0 0.0
    %180 = vmatpush1.msra.mxu0 %v138
    %181 = vmatprep.subr.mxu0 0.0
    %182 = vmatpush1.msra.mxu0 %v137
    %183 = vmatprep.subr.mxu0 0.0
    %184 = vmatpush1.msra.mxu0 %v136
    %185 = vmatprep.subr.mxu0 0.0
    %186 = vmatpush1.msra.mxu0 %v135
    %187 = vmatprep.subr.mxu0 0.0
    %188 = vmatpush1.msra.mxu0 %v134
    %189 = vmatprep.subr.mxu0 0.0
    %190 = vmatpush2.msra.mxu0 0.0
    %191 = vmatprep.subr.mxu0 0.0
    %192 = vmatpush2.msra.mxu0 0.0
    %193 = vmatprep.subr.mxu0 0.0
    %194 = vmatpush2.msra.mxu0 0.0
    %195 = vmatprep.subr.mxu0 0.0
    %196 = vmatpush2.msra.mxu0 0.0
    %197 = vmatprep.subr.mxu0 0.0
    %198 = vmatpush2.msra.mxu0 0.0
    %199 = vmatprep.subr.mxu0 0.0
    %200 = vmatpush2.msra.mxu0 0.0
    %201 = vmatprep.subr.mxu0 0.0
    %202 = vmatpush2.msra.mxu0 0.0
    %203 = vmatprep.subr.mxu0 0.0
    %204 = vmatpush2.msra.mxu0 0.0
    %205 = vmatprep.subr.mxu0 0.0
    %206 = vmatpush2.msra.mxu0 0.0
    %207 = vmatprep.subr.mxu0 0.0
    %208 = vmatpush2.msra.mxu0 0.0
    %209 = vmatprep.subr.mxu0 0.0
    %210 = vmatpush2.msra.mxu0 0.0
    %211 = vmatprep.subr.mxu0 0.0
    %212 = vmatpush2.msra.mxu0 0.0
    %213 = vmatprep.subr.mxu0 0.0
    %214 = vmatpush2.msra.mxu0 0.0
    %215 = vmatprep.subr.mxu0 0.0
    %216 = vmatpush2.msra.mxu0 0.0
    %217 = vmatprep.subr.mxu0 0.0
    %218 = vmatpush2.msra.mxu0 0.0
    %219 = vmatprep.subr.mxu0 0.0
    %220 = vmatpush2.msra.mxu0 0.0
    %221 = vmatprep.mubr.f32.mxu0 0.0
    %222 = vmatmul.mubr.f32.gmra.mxu0 %v132
    %v223 = vpop.f32.mrf.mxu0
    %v224 = vadd.f32 %v155, %v223
    %v225 = vpop.f32.mrf.mxu0
    %226 = vmatprep.mubr.f32.mxu0 0.0
    %227 = vmatmul.mubr.f32.gmra.mxu0 %v133
    %v228 = vpop.f32.mrf.mxu0
    %v229 = vadd.f32 %v155, %v228
    %v230 = vpop.f32.mrf.mxu0
    %231 = vdwg.mxu0
    %232 = vst.msk [vmem:[#allocation2] sm:$0xff] %vm34, %v224
    %233 = vst.msk [vmem:[#allocation2 + $0x8] sm:$0xff] %vm34, %v229
    // Predicated region
    $region22: #{mlp_forward.1} parent=1 // pred_check
      _
    $region23: #{mlp_forward.1} parent=1 // pred_check_branch
      %235 = sbr.rel (0) target = $region25
    $region24: #{mlp_forward.1} parent=1 // pred_region
      %s237 = ssub.s32 256, 256
      %238 = vsyncadd [#allocation3], %s237
      %s239 = sshll.u32 [#allocation2], 4
      %s240 = int_to_ptr.vmem [resolvable:$true] %s239
      %245 = dma.vmem_to_hbm [thread:$0]  %s240, 256, %s5, [#allocation3], 128, 128, 8
    $region25: #{mlp_forward.1} parent=1 // pred_fallthru
      _
    // Predicated region
    $region26: #{mlp_forward.1} parent=1 // pred_check
      _
    $region27: #{mlp_forward.1} parent=1 // pred_check_branch
      %247 = sbr.rel (0) target = $region29
    $region28: #{mlp_forward.1} parent=1 // pred_region
      %248 = dma.done [#allocation3], 256
    $region29: #{mlp_forward.1} parent=1 // pred_fallthru
      _
    %249 = vsyncpa [#allocation3], 1

</llo_original>
